<compile_context>
chip_gen: v7x
topology: tpu7x:2x2x1
jax: 0.10.0
libtpu: 0.0.40
codegen_flags: <defaults>
</compile_context>

<pallas_src>
import functools

import jax
import jax.numpy as jnp
from jax.experimental import pallas as pl
from jax.experimental.pallas import tpu as pltpu

EPS = 1e-5          # torch.nn.LayerNorm default
NEG_BIAS = -1e9     # finite "masked key" bias (avoids NaN on fully-masked rows)

_BUFFERED_OK = [True]        # set to False once if pl.Buffered(1) is rejected
_VMEM_LIMIT_CACHE = []


def _vmem_limit_bytes():
    """Per-core VMEM budget with headroom (v5e/v6e ~112 MiB, v7x ~56 MiB)."""
    if not _VMEM_LIMIT_CACHE:
        try:
            cap = int(pltpu.get_tpu_info().vmem_capacity_bytes)
        except Exception:
            cap = 64 * 1024 * 1024
        _VMEM_LIMIT_CACHE.append(
            max(32 * 1024 * 1024, min(cap - 8 * 1024 * 1024, 112 * 1024 * 1024)))
    return _VMEM_LIMIT_CACHE[0]


def _call_maybe_buffered(fn):
    """fn(buffered: bool) -> result.  Try single-buffered weight specs first."""
    if _BUFFERED_OK[0]:
        try:
            return fn(True)
        except Exception:
            _BUFFERED_OK[0] = False
    return fn(False)


def _layernorm(x, gamma, beta):
    # CLIP LayerNorm: always computed in fp32.
    xf = x.astype(jnp.float32)
    mu = jnp.mean(xf, axis=-1, keepdims=True)
    var = jnp.mean(jnp.square(xf - mu), axis=-1, keepdims=True)
    return (xf - mu) * jax.lax.rsqrt(var + EPS) * gamma + beta


def _heads_per_group(num_heads, hd):
    """Group heads so each slab written to the MHA scratch is 128-lane aligned."""
    if hd % 128 == 0:
        return 1
    for g in range(1, num_heads + 1):
        if num_heads % g == 0 and (g * hd) % 128 == 0:
            return g
    # No 128-aligned grouping exists; if the whole head dim fits in <=128 lanes
    # write everything as a single slab, otherwise fall back to per-head writes.
    return num_heads if num_heads * hd <= 128 else 1


# ---------------- kernel 1: patch embedding (Conv2d stride==kernel -> matmul) ------
# Writes directly into the pre-padded (1, S_pad, D) output: cls token at row 0,
# the N patch embeddings at rows 1..N, zeros in the sublane-padding tail.
def _embed_kernel(xp_ref, w_ref, cls_ref, o_ref):
    n = xp_ref.shape[1]
    s_pad = o_ref.shape[1]
    d = o_ref.shape[2]
    emb = jnp.dot(xp_ref[0], w_ref[...], preferred_element_type=jnp.float32)
    o_ref[0, pl.ds(0, 1), :] = cls_ref[...].astype(o_ref.dtype)
    o_ref[0, pl.ds(1, n), :] = emb.astype(o_ref.dtype)
    if s_pad > n + 1:  # static
        o_ref[0, pl.ds(n + 1, s_pad - n - 1), :] = jnp.zeros(
            (s_pad - n - 1, d), o_ref.dtype)


# ---------------- fallback kernels (only used when the Transformer has 0 blocks) ---
def _pre_kernel(x_ref, pos_ref, g_ref, b_ref, o_ref):
    x = x_ref[0].astype(jnp.float32) + pos_ref[...]
    o_ref[0] = _layernorm(x, g_ref[...], b_ref[...]).astype(o_ref.dtype)


def _ln_kernel(x_ref, g_ref, b_ref, o_ref):
    o_ref[0] = _layernorm(x_ref[0], g_ref[...], b_ref[...]).astype(o_ref.dtype)


# ---------------- kernel 2: ResidualAttentionBlock (one batch element / program) ---
# Optionally fuses (pos-add + ln_pre) as a prologue and ln_post as an epilogue.
def _resblock_kernel(*args, num_heads, heads_per_group, fuse_pre, fuse_post):
    it = iter(args)
    x_ref = next(it)
    bias_ref = next(it)
    if fuse_pre:
        pos_ref, preg_ref, preb_ref = next(it), next(it), next(it)
    (ln1g_ref, ln1b_ref, wqkv_ref, bqkv_ref, wo_ref, bo_ref,
     ln2g_ref, ln2b_ref, wfc_ref, bfc_ref, wpr_ref, bpr_ref) = (
        next(it) for _ in range(12))
    if fuse_post:
        postg_ref, postb_ref = next(it), next(it)
    o_ref = next(it)
    attn_ref = next(it)          # (S, D) bf16 scratch for concat'd head outputs

    x = x_ref[0].astype(jnp.float32)                 # (S, D) fp32 residual stream
    if fuse_pre:
        x = _layernorm(x + pos_ref[...].astype(jnp.float32),
                       preg_ref[...], preb_ref[...])
    S, D = x.shape
    hd = D // num_heads
    g = heads_per_group
    gw = g * hd                                      # group slab width (lanes)
    bias = bias_ref[0]                               # (1, S) additive key bias

    # --- attention branch: x + out_proj(MHA(ln_1(x))) ---
    h = _layernorm(x, ln1g_ref[...], ln1b_ref[...]).astype(jnp.bfloat16)
    qkv = jnp.dot(h, wqkv_ref[...],
                  preferred_element_type=jnp.float32) + bqkv_ref[...]   # (S, 3D)
    for gi in range(num_heads // g):
        pieces = []
        for hj in range(g):
            lo = (gi * g + hj) * hd
            qh = qkv[:, lo:lo + hd].astype(jnp.bfloat16)        # 1/sqrt(hd) pre-folded
            kh = qkv[:, D + lo:D + lo + hd].astype(jnp.bfloat16)
            vh = qkv[:, 2 * D + lo:2 * D + lo + hd].astype(jnp.bfloat16)
            s = jax.lax.dot_general(qh, kh, (((1,), (1,)), ((), ())),
                                    preferred_element_type=jnp.float32)  # (S, S)
            s = s + bias
            e = jnp.exp(s - jnp.max(s, axis=-1, keepdims=True))
            denom = jnp.sum(e, axis=-1, keepdims=True)
            # deferred softmax normalization: scale the (S, hd) accumulator,
            # not the (S, S) probability matrix.
            pv = jnp.dot(e.astype(jnp.bfloat16), vh,
                         preferred_element_type=jnp.float32)
            pieces.append(pv * pl.reciprocal(denom, approx=True))
        slab = pieces[0] if g == 1 else jnp.concatenate(pieces, axis=-1)
        attn_ref[:, gi * gw:(gi + 1) * gw] = slab.astype(attn_ref.dtype)
    attn = jnp.dot(attn_ref[...], wo_ref[...],
                   preferred_element_type=jnp.float32) + bo_ref[...]
    x = x + attn

    # --- MLP branch: x + c_proj(QuickGELU(c_fc(ln_2(x)))) ---
    h2 = _layernorm(x, ln2g_ref[...], ln2b_ref[...]).astype(jnp.bfloat16)
    f = jnp.dot(h2, wfc_ref[...], preferred_element_type=jnp.float32) + bfc_ref[...]
    f = f * jax.nn.sigmoid(1.702 * f)                # QuickGELU in fp32
    m = jnp.dot(f.astype(jnp.bfloat16), wpr_ref[...],
                preferred_element_type=jnp.float32) + bpr_ref[...]
    y = x + m
    if fuse_post:
        y = _layernorm(y, postg_ref[...], postb_ref[...])
    o_ref[0] = y.astype(o_ref.dtype)


# ---------------- wrappers ----------------------------------------------------------
def _prepare_blocks(blocks, D, heads):
    """Fold 1/sqrt(hd) into the Q projection; cast matmul weights to bf16."""
    hd = D // heads
    qscale = jnp.concatenate(
        [jnp.full((D,), hd ** -0.5, jnp.float32),
         jnp.ones((2 * D,), jnp.float32)])[None, :]
    out = []
    for blk in blocks:
        out.append({
            'ln1_g': blk['ln1_g'].astype(jnp.float32),
            'ln1_b': blk['ln1_b'].astype(jnp.float32),
            'wqkv': (blk['wqkv'] * qscale).astype(jnp.bfloat16),
            'bqkv': (blk['bqkv'] * qscale).astype(jnp.float32),
            'wo': blk['wo'].astype(jnp.bfloat16),
            'bo': blk['bo'].astype(jnp.float32),
            'ln2_g': blk['ln2_g'].astype(jnp.float32),
            'ln2_b': blk['ln2_b'].astype(jnp.float32),
            'wfc': blk['wfc'].astype(jnp.bfloat16),
            'bfc': blk['bfc'].astype(jnp.float32),
            'wpr': blk['wpr'].astype(jnp.bfloat16),
            'bpr': blk['bpr'].astype(jnp.float32),
        })
    return out


def _const_spec(shape, buffered):
    """BlockSpec for a grid-invariant (weight/bias) operand; single-buffered."""
    idx = lambda b, n=len(shape): (0,) * n
    if buffered:
        return pl.BlockSpec(shape, idx, pipeline_mode=pl.Buffered(1))
    return pl.BlockSpec(shape, idx)


def _patch_embed(patches, w, cls, B, N, K, D, S_pad):
    def call(buffered):
        return pl.pallas_call(
            _embed_kernel,
            out_shape=jax.ShapeDtypeStruct((B, S_pad, D), jnp.float32),
            grid=(B,),
            in_specs=[pl.BlockSpec((1, N, K), lambda b: (b, 0, 0)),
                      _const_spec((K, D), buffered),
                      _const_spec((1, D), buffered)],
            out_specs=pl.BlockSpec((1, S_pad, D), lambda b: (b, 0, 0)),
            compiler_params=pltpu.CompilerParams(
                dimension_semantics=("parallel",),
                vmem_limit_bytes=_vmem_limit_bytes()),
        )(patches, w, cls)
    return _call_maybe_buffered(call)


def _apply_resblock(x, bias, blk, num_heads, *, fuse_pre, fuse_post, pre, post,
                    out_dtype, buffered):
    B, S, D = x.shape
    hd = D // num_heads
    g = _heads_per_group(num_heads, hd)

    operands = [x, bias]
    in_specs = [pl.BlockSpec((1, S, D), lambda b: (b, 0, 0)),
                pl.BlockSpec((1, 1, S), lambda b: (b, 0, 0))]
    if fuse_pre:
        pos, preg, preb = pre
        for p in (pos, preg, preb):
            operands.append(p)
            in_specs.append(_const_spec(p.shape, buffered))
    for n in ['ln1_g', 'ln1_b', 'wqkv', 'bqkv', 'wo', 'bo',
              'ln2_g', 'ln2_b', 'wfc', 'bfc', 'wpr', 'bpr']:
        p = blk[n]
        operands.append(p)
        in_specs.append(_const_spec(p.shape, buffered))
    if fuse_post:
        postg, postb = post
        for p in (postg, postb):
            operands.append(p)
            in_specs.append(_const_spec(p.shape, buffered))

    kernel = functools.partial(_resblock_kernel, num_heads=num_heads,
                               heads_per_group=g, fuse_pre=fuse_pre,
                               fuse_post=fuse_post)
    return pl.pallas_call(
        kernel,
        out_shape=jax.ShapeDtypeStruct((B, S, D), out_dtype),
        grid=(B,),
        in_specs=in_specs,
        out_specs=pl.BlockSpec((1, S, D), lambda b: (b, 0, 0)),
        scratch_shapes=[pltpu.VMEM((S, D), jnp.bfloat16)],
        compiler_params=pltpu.CompilerParams(
            dimension_semantics=("parallel",),
            vmem_limit_bytes=_vmem_limit_bytes()),
    )(*operands)


def visual_transformer_forward(x, x_mask, params, patch_size, heads,
                               act_dtype=jnp.float32):
    """act_dtype: inter-layer activation dtype (use bf16 on v5e if the
    resulting numeric drift vs. the fp32 torch reference is acceptable)."""
    B, C, H, W = x.shape
    p = patch_size
    Hp, Wp = H // p, W // p
    N = Hp * Wp
    D = params['conv_w'].shape[0]
    S = N + 1
    assert D % heads == 0, "d_model must be divisible by n_head"
    S_pad = ((S + 7) // 8) * 8          # sublane-aligned sequence length

    # --- conv1 (bias=False, stride == kernel): im2col glue + Pallas matmul that
    #     writes directly into the pre-padded (B, S_pad, D) activation ---
    patches = (x.reshape(B, C, Hp, p, Wp, p)
                .transpose(0, 2, 4, 1, 3, 5)
                .reshape(B, N, C * p * p)).astype(jnp.bfloat16)
    K = C * p * p
    w = params['conv_w'].reshape(D, K).T.astype(jnp.bfloat16)          # (K, D)
    cls = params['cls'].reshape(1, D).astype(jnp.float32)
    xs = _patch_embed(patches, w, cls, B, N, K, D, S_pad)              # (B,S_pad,D)

    pos = params['pos'].astype(jnp.float32)                            # (S, D)
    if S_pad != S:
        pos = jnp.pad(pos, ((0, S_pad - S), (0, 0)))
    ln_pre_g = params['ln_pre_g'].astype(jnp.float32)
    ln_pre_b = params['ln_pre_b'].astype(jnp.float32)
    ln_post_g = params['ln_post_g'].astype(jnp.float32)
    ln_post_b = params['ln_post_b'].astype(jnp.float32)

    # --- additive key bias: key_padding_mask (True -> masked) + padded keys ---
    if x_mask is None:
        key_bias = jnp.zeros((B, S), jnp.float32)
    else:
        key_bias = jnp.where(x_mask.astype(bool), NEG_BIAS, 0.0)
        key_bias = key_bias.astype(jnp.float32).reshape(B, S)
    if S_pad != S:
        key_bias = jnp.concatenate(
            [key_bias, jnp.full((B, S_pad - S), NEG_BIAS, jnp.float32)], axis=1)
    bias = key_bias.reshape(B, 1, S_pad)

    # --- Transformer: reference builds (layers - 1) resblocks.
    #     pos-add + ln_pre fused into block 0, ln_post fused into the last block.
    blocks = _prepare_blocks(params['blocks'], D, heads)
    n_blocks = len(blocks)
    if n_blocks == 0:
        # degenerate config: standalone pre/post passes
        xs = pl.pallas_call(
            _pre_kernel,
            out_shape=jax.ShapeDtypeStruct((B, S_pad, D), jnp.float32),
            grid=(B,),
            in_specs=[pl.BlockSpec((1, S_pad, D), lambda b: (b, 0, 0)),
                      pl.BlockSpec((S_pad, D), lambda b: (0, 0)),
                      pl.BlockSpec((1, D), lambda b: (0, 0)),
                      pl.BlockSpec((1, D), lambda b: (0, 0))],
            out_specs=pl.BlockSpec((1, S_pad, D), lambda b: (b, 0, 0)),
            compiler_params=pltpu.CompilerParams(
                dimension_semantics=("parallel",)),
        )(xs, pos, ln_pre_g, ln_pre_b)
        xs = pl.pallas_call(
            _ln_kernel,
            out_shape=jax.ShapeDtypeStruct((B, S_pad, D), jnp.float32),
            grid=(B,),
            in_specs=[pl.BlockSpec((1, S_pad, D), lambda b: (b, 0, 0)),
                      pl.BlockSpec((1, D), lambda b: (0, 0)),
                      pl.BlockSpec((1, D), lambda b: (0, 0))],
            out_specs=pl.BlockSpec((1, S_pad, D), lambda b: (b, 0, 0)),
            compiler_params=pltpu.CompilerParams(
                dimension_semantics=("parallel",)),
        )(xs, ln_post_g, ln_post_b)
    else:
        for li, blk in enumerate(blocks):
            fuse_pre = (li == 0)
            fuse_post = (li == n_blocks - 1)
            out_dtype = jnp.float32 if fuse_post else act_dtype
            xs = _call_maybe_buffered(
                lambda buffered, xs=xs, blk=blk, fuse_pre=fuse_pre,
                       fuse_post=fuse_post, out_dtype=out_dtype:
                _apply_resblock(
                    xs, bias, blk, heads,
                    fuse_pre=fuse_pre, fuse_post=fuse_post,
                    pre=(pos, ln_pre_g, ln_pre_b),
                    post=(ln_post_g, ln_post_b),
                    out_dtype=out_dtype, buffered=buffered))

    return xs[:, :S, :]        # drop sublane padding


def init_params(key, width, layers, heads, patch_size, resolution_after):
    del heads
    S = (resolution_after // patch_size) ** 2 + 1
    n_blocks = max(layers - 1, 0)
    keys = iter(jax.random.split(key, 3 + 8 * max(n_blocks, 1)))
    scale = width ** -0.5
    D = width
    p = {
        'conv_w': 0.02 * jax.random.normal(next(keys), (D, 3, patch_size, patch_size), jnp.float32),
        'cls': scale * jax.random.normal(next(keys), (D,), jnp.float32),
        'pos': scale * jax.random.normal(next(keys), (S, D), jnp.float32),
        'ln_pre_g': jnp.ones((1, D), jnp.float32),
        'ln_pre_b': jnp.zeros((1, D), jnp.float32),
        'ln_post_g': jnp.ones((1, D), jnp.float32),
        'ln_post_b': jnp.zeros((1, D), jnp.float32),
        'blocks': [],
    }
    for _ in range(n_blocks):
        blk = {
            'ln1_g': jnp.ones((1, D), jnp.float32),
            'ln1_b': jnp.zeros((1, D), jnp.float32),
            # stored pre-transposed: wqkv = in_proj_weight.T, wo = out_proj.weight.T, etc.
            'wqkv': 0.02 * jax.random.normal(next(keys), (D, 3 * D), jnp.float32),
            'bqkv': 0.02 * jax.random.normal(next(keys), (1, 3 * D), jnp.float32),
            'wo': 0.02 * jax.random.normal(next(keys), (D, D), jnp.float32),
            'bo': 0.02 * jax.random.normal(next(keys), (1, D), jnp.float32),
            'ln2_g': jnp.ones((1, D), jnp.float32),
            'ln2_b': jnp.zeros((1, D), jnp.float32),
            'wfc': 0.02 * jax.random.normal(next(keys), (D, 4 * D), jnp.float32),
            'bfc': 0.02 * jax.random.normal(next(keys), (1, 4 * D), jnp.float32),
            'wpr': 0.02 * jax.random.normal(next(keys), (4 * D, D), jnp.float32),
            'bpr': 0.02 * jax.random.normal(next(keys), (1, D), jnp.float32),
        }
        p['blocks'].append(blk)
    return p


if __name__ == "__main__":
    # small shapes consistent with the module
    B = 2
    input_resolution = 16
    patch_size = 4
    width = 32
    layers = 3            # reference Transformer builds (layers - 1) = 2 resblocks
    heads = 4
    resolution_after = 16

    key = jax.random.PRNGKey(0)
    k_params, k_x = jax.random.split(key)
    params = init_params(k_params, width, layers, heads, patch_size, resolution_after)

    x = jax.random.normal(k_x, (B, 3, input_resolution, input_resolution), jnp.float32)
    x_mask = None  # key_padding_mask path supported via finite additive bias; None here

    out = visual_transformer_forward(x, x_mask, params, patch_size, heads)
    out = jax.block_until_ready(out)

    S = (input_resolution // patch_size) ** 2 + 1
    assert out.shape == (B, S, width), out.shape
    assert bool(jnp.all(jnp.isfinite(out)))
    print("KERNEL_OK")
</pallas_src>

<mosaic_0001>
module attributes {stable_mosaic.version = 11 : i64} {
  func.func @_embed_kernel(%arg0: i32, %arg1: memref<1x16x48xbf16, #tpu.memory_space<vmem>>, %arg2: memref<48x32xbf16, #tpu.memory_space<vmem>>, %arg3: memref<1x32xf32, #tpu.memory_space<vmem>>, %arg4: memref<1x24x32xf32, #tpu.memory_space<vmem>>) attributes {dimension_semantics = [#tpu.dimension_semantics<parallel>], iteration_bounds = array<i64: 2>, scalar_prefetch = 0 : i64, scratch_operands = 0 : i64, tpu.core_type = #tpu.core_type<tc>, window_params = [{transform_indices = @transform_0, window_bounds = array<i64: 1, 16, 48>}, {pipeline_mode = #tpu.pipeline_mode<synchronous>, transform_indices = @transform_1, window_bounds = array<i64: 48, 32>}, {pipeline_mode = #tpu.pipeline_mode<synchronous>, transform_indices = @transform_2, window_bounds = array<i64: 1, 32>}, {transform_indices = @transform_3, window_bounds = array<i64: 1, 24, 32>}]} {
    %c0 = arith.constant 0 : index
    %c0_0 = arith.constant 0 : index
    %c0_1 = arith.constant 0 : index
    %0 = vector.load %arg1[%c0, %c0_0, %c0_1] : memref<1x16x48xbf16, #tpu.memory_space<vmem>>, vector<1x16x48xbf16>
    %1 = vector.shape_cast %0 : vector<1x16x48xbf16> to vector<16x48xbf16>
    %c0_2 = arith.constant 0 : index
    %c0_3 = arith.constant 0 : index
    %2 = vector.load %arg2[%c0_2, %c0_3] : memref<48x32xbf16, #tpu.memory_space<vmem>>, vector<48x32xbf16>
    %cst = arith.constant dense<0.000000e+00> : vector<16x32xf32>
    %3 = tpu.matmul %1, %2, %cst {dimension_numbers = #tpu.dot_dimension_numbers<[1], [0], [0], [1], [0, 0, 1, 1], [], []>} : vector<16x48xbf16>, vector<48x32xbf16>, vector<16x32xf32> -> vector<16x32xf32>
    %c0_4 = arith.constant 0 : index
    %c0_5 = arith.constant 0 : index
    %4 = vector.load %arg3[%c0_4, %c0_5] : memref<1x32xf32, #tpu.memory_space<vmem>>, vector<1x32xf32>
    %c0_6 = arith.constant 0 : index
    %c0_7 = arith.constant 0 : index
    %c0_8 = arith.constant 0 : index
    %5 = vector.load %arg4[%c0_6, %c0_7, %c0_8] : memref<1x24x32xf32, #tpu.memory_space<vmem>>, vector<1x1x32xf32>
    %6 = vector.shape_cast %5 : vector<1x1x32xf32> to vector<1x32xf32>
    %7 = vector.shape_cast %4 : vector<1x32xf32> to vector<1x1x32xf32>
    tpu.vector_store %arg4[%c0_6, %c0_7, %c0_8], %7 {strides = array<i32>} : memref<1x24x32xf32, #tpu.memory_space<vmem>>, vector<1x1x32xf32>,
    %c0_9 = arith.constant 0 : index
    %c1 = arith.constant 1 : index
    %c0_10 = arith.constant 0 : index
    %8 = vector.load %arg4[%c0_9, %c1, %c0_10] : memref<1x24x32xf32, #tpu.memory_space<vmem>>, vector<1x16x32xf32>
    %9 = vector.shape_cast %8 : vector<1x16x32xf32> to vector<16x32xf32>
    %10 = vector.shape_cast %3 : vector<16x32xf32> to vector<1x16x32xf32>
    tpu.vector_store %arg4[%c0_9, %c1, %c0_10], %10 {strides = array<i32>} : memref<1x24x32xf32, #tpu.memory_space<vmem>>, vector<1x16x32xf32>,
    %cst_11 = arith.constant 0.000000e+00 : f32
    %11 = vector.broadcast %cst_11 : f32 to vector<7x32xf32>
    %c0_12 = arith.constant 0 : index
    %c17 = arith.constant 17 : index
    %c0_13 = arith.constant 0 : index
    %12 = vector.load %arg4[%c0_12, %c17, %c0_13] : memref<1x24x32xf32, #tpu.memory_space<vmem>>, vector<1x7x32xf32>
    %13 = vector.shape_cast %12 : vector<1x7x32xf32> to vector<7x32xf32>
    %14 = vector.shape_cast %11 : vector<7x32xf32> to vector<1x7x32xf32>
    tpu.vector_store %arg4[%c0_12, %c17, %c0_13], %14 {strides = array<i32>} : memref<1x24x32xf32, #tpu.memory_space<vmem>>, vector<1x7x32xf32>,
    return
  }
  func.func @transform_0(%arg0: i32) -> (i32, i32, i32) {
    %c0_i32 = arith.constant 0 : i32
    %c0_i32_0 = arith.constant 0 : i32
    %c0_i32_1 = arith.constant 0 : i32
    return %arg0, %c0_i32, %c0_i32_0 : i32, i32, i32
  }
  func.func @transform_1(%arg0: i32) -> (i32, i32) {
    %c0_i32 = arith.constant 0 : i32
    %c0_i32_0 = arith.constant 0 : i32
    %c0_i32_1 = arith.constant 0 : i32
    return %c0_i32, %c0_i32_0 : i32, i32
  }
  func.func @transform_2(%arg0: i32) -> (i32, i32) {
    %c0_i32 = arith.constant 0 : i32
    %c0_i32_0 = arith.constant 0 : i32
    %c0_i32_1 = arith.constant 0 : i32
    return %c0_i32, %c0_i32_0 : i32, i32
  }
  func.func @transform_3(%arg0: i32) -> (i32, i32, i32) {
    %c0_i32 = arith.constant 0 : i32
    %c0_i32_0 = arith.constant 0 : i32
    %c0_i32_1 = arith.constant 0 : i32
    return %arg0, %c0_i32, %c0_i32_0 : i32, i32, i32
  }
}

module attributes {stable_mosaic.version = 11 : i64} {
  func.func @_embed_kernel(%arg0: i32, %arg1: memref<1x16x48xbf16, #tpu.memory_space<vmem>>, %arg2: memref<48x32xbf16, #tpu.memory_space<vmem>>, %arg3: memref<1x32xf32, #tpu.memory_space<vmem>>, %arg4: memref<1x24x32xf32, #tpu.memory_space<vmem>>) attributes {dimension_semantics = [#tpu.dimension_semantics<parallel>], iteration_bounds = array<i64: 2>, scalar_prefetch = 0 : i64, scratch_operands = 0 : i64, tpu.core_type = #tpu.core_type<tc>, window_params = [{transform_indices = @transform_0, window_bounds = array<i64: 1, 16, 48>}, {pipeline_mode = #tpu.pipeline_mode<synchronous>, transform_indices = @transform_1, window_bounds = array<i64: 48, 32>}, {pipeline_mode = #tpu.pipeline_mode<synchronous>, transform_indices = @transform_2, window_bounds = array<i64: 1, 32>}, {transform_indices = @transform_3, window_bounds = array<i64: 1, 24, 32>}]} {
    %c0 = arith.constant 0 : index
    %c0_0 = arith.constant 0 : index
    %c0_1 = arith.constant 0 : index
    %0 = vector.load %arg1[%c0, %c0_0, %c0_1] : memref<1x16x48xbf16, #tpu.memory_space<vmem>>, vector<1x16x48xbf16>
    %1 = vector.shape_cast %0 : vector<1x16x48xbf16> to vector<16x48xbf16>
    %c0_2 = arith.constant 0 : index
    %c0_3 = arith.constant 0 : index
    %2 = vector.load %arg2[%c0_2, %c0_3] : memref<48x32xbf16, #tpu.memory_space<vmem>>, vector<48x32xbf16>
    %cst = arith.constant dense<0.000000e+00> : vector<16x32xf32>
    %3 = tpu.matmul %1, %2, %cst {dimension_numbers = #tpu.dot_dimension_numbers<[1], [0], [0], [1], [0, 0, 1, 1], [], []>} : vector<16x48xbf16>, vector<48x32xbf16>, vector<16x32xf32> -> vector<16x32xf32>
    %c0_4 = arith.constant 0 : index
    %c0_5 = arith.constant 0 : index
    %4 = vector.load %arg3[%c0_4, %c0_5] : memref<1x32xf32, #tpu.memory_space<vmem>>, vector<1x32xf32>
    %c0_6 = arith.constant 0 : index
    %c0_7 = arith.constant 0 : index
    %c0_8 = arith.constant 0 : index
    %5 = vector.load %arg4[%c0_6, %c0_7, %c0_8] : memref<1x24x32xf32, #tpu.memory_space<vmem>>, vector<1x1x32xf32>
    %6 = vector.shape_cast %5 : vector<1x1x32xf32> to vector<1x32xf32>
    %7 = vector.shape_cast %4 : vector<1x32xf32> to vector<1x1x32xf32>
    tpu.vector_store %arg4[%c0_6, %c0_7, %c0_8], %7 {strides = array<i32>} : memref<1x24x32xf32, #tpu.memory_space<vmem>>, vector<1x1x32xf32>,
    %c0_9 = arith.constant 0 : index
    %c1 = arith.constant 1 : index
    %c0_10 = arith.constant 0 : index
    %8 = vector.load %arg4[%c0_9, %c1, %c0_10] : memref<1x24x32xf32, #tpu.memory_space<vmem>>, vector<1x16x32xf32>
    %9 = vector.shape_cast %8 : vector<1x16x32xf32> to vector<16x32xf32>
    %10 = vector.shape_cast %3 : vector<16x32xf32> to vector<1x16x32xf32>
    tpu.vector_store %arg4[%c0_9, %c1, %c0_10], %10 {strides = array<i32>} : memref<1x24x32xf32, #tpu.memory_space<vmem>>, vector<1x16x32xf32>,
    %cst_11 = arith.constant 0.000000e+00 : f32
    %11 = vector.broadcast %cst_11 : f32 to vector<7x32xf32>
    %c0_12 = arith.constant 0 : index
    %c17 = arith.constant 17 : index
    %c0_13 = arith.constant 0 : index
    %12 = vector.load %arg4[%c0_12, %c17, %c0_13] : memref<1x24x32xf32, #tpu.memory_space<vmem>>, vector<1x7x32xf32>
    %13 = vector.shape_cast %12 : vector<1x7x32xf32> to vector<7x32xf32>
    %14 = vector.shape_cast %11 : vector<7x32xf32> to vector<1x7x32xf32>
    tpu.vector_store %arg4[%c0_12, %c17, %c0_13], %14 {strides = array<i32>} : memref<1x24x32xf32, #tpu.memory_space<vmem>>, vector<1x7x32xf32>,
    return
  }
  func.func @transform_0(%arg0: i32) -> (i32, i32, i32) {
    %c0_i32 = arith.constant 0 : i32
    %c0_i32_0 = arith.constant 0 : i32
    %c0_i32_1 = arith.constant 0 : i32
    return %arg0, %c0_i32, %c0_i32_0 : i32, i32, i32
  }
  func.func @transform_1(%arg0: i32) -> (i32, i32) {
    %c0_i32 = arith.constant 0 : i32
    %c0_i32_0 = arith.constant 0 : i32
    %c0_i32_1 = arith.constant 0 : i32
    return %c0_i32, %c0_i32_0 : i32, i32
  }
  func.func @transform_2(%arg0: i32) -> (i32, i32) {
    %c0_i32 = arith.constant 0 : i32
    %c0_i32_0 = arith.constant 0 : i32
    %c0_i32_1 = arith.constant 0 : i32
    return %c0_i32, %c0_i32_0 : i32, i32
  }
  func.func @transform_3(%arg0: i32) -> (i32, i32, i32) {
    %c0_i32 = arith.constant 0 : i32
    %c0_i32_0 = arith.constant 0 : i32
    %c0_i32_1 = arith.constant 0 : i32
    return %arg0, %c0_i32, %c0_i32_0 : i32, i32, i32
  }
}

</mosaic_0001>

<llo_original>
// kernel: tpu_custom_call.1
$region0: #{tpu_custom_call.1}
  #allocation0 [shape = 'u32[]', space=smem, size = 0x4, offset = 0x4, fixed_abs, tag = 'smem constant byte address 0x4 - core index']
  #allocation1 [shape = 'u32[144,128]{1,0:T(1,128)}', space=vmem, size = 0x12000, scoped, tag = 'internal scratch']
  %s0 = inlined_call_operand.vmem [shape: bf16[2,16,48], index: 0, kind: input, shape index: {}]
  %s1 = inlined_call_operand.vmem [shape: bf16[48,32], index: 1, kind: input, shape index: {}]
  %s2 = inlined_call_operand.vmem [shape: f32[1,32], index: 2, kind: input, shape index: {}]
  %s3 = inlined_call_operand.hbm [shape: f32[2,24,32], index: 3, kind: output, shape index: {}]
  %s4 = sld [smem:[#allocation0]]
  $region45: #{tpu_custom_call.1} parent=0
    _
  %s6 = ssub.s32 1, %s4
  %s7 = scalar_select 0, %s6, %s4
  $region1: #{tpu_custom_call.1} parent=0
    #allocation2 [shape = 'u8[24576]{0}', space=vmem, size = 0x6000, scoped, tag = 'output window, operand 0']
    #allocation3 [shape = 's32[2]{0}', space=sflag, size = 0x8, scoped, tag = 'scoped memory for tpu_custom_call.1']
    %8 = vsyncpa [#allocation3], 0
    %s9 = scalar_lea.sflag [#allocation3], 1
    %10 = vsyncpa %s9, 0
    loop: start=0, step=1, limit=4
    $region2: #{tpu_custom_call.1} parent=1 // loop_pre_header
      _
    $region3: #{tpu_custom_call.1} parent=1 // loop_header
      %s12 = sphi 0, %s16
      %p13 = scmp.ge.s32.totalorder %s12, 4
      %s22 = sphi 0, %s24
      %s25 = sphi 0, %s22
      %s26 = sphi 0, %s25
      %s42 = sphi 0, %s26
      %s46 = sphi 0, %s46
      %s48 = sphi 0, %s46
      %s49 = sphi 0, %s48
      %s63 = sphi 0, %s49
      %s67 = sphi 0, %s67
      %s69 = sphi 0, %s67
      %s70 = sphi 0, %s69
      %s84 = sphi 0, %s70
      %s90 = sphi 0, %s92
      %s93 = sphi 0, %s90
      %s94 = sphi 0, %s93
      %s110 = sphi 0, %s94
    $region4: #{tpu_custom_call.1} parent=1 // loop_header_branch
      %15 = sbr.rel (%p13) target = $region8
    $region5: #{tpu_custom_call.1} parent=1 // loop_body
      %s17 = ssub.s32 %s12, 1
      %s18 = ssub.s32 %s12, 2
      %s19 = sadd.s32 %s12, 1
      %s20 = ssub.s32 %s12, %s19
      %p21 = scmp.eq.s32.totalorder %s20, 0
      %s23 = sadd.s32 %s22, 1
      %s24 = scalar_select %p21, %s22, %s23
      %p27 = pneg %p21
      %p28 = scmp.eq.s32.totalorder %s12, 1
      %p29 = por %p27, %p28
      %p30 = scmp.ne.s32.totalorder %s22, %s25
      %p31 = scmp.eq.s32.totalorder %s12, 0
      %p32 = por %p30, %p31
      %p33 = scmp.ne.s32.totalorder %s22, %s25
      %p34 = scmp.eq.s32.totalorder %s17, 1
      %p35 = por %p33, %p34
      %p36 = scmp.ne.s32.totalorder %s25, %s26
      %p37 = scmp.eq.s32.totalorder %s17, 0
      %p38 = por %p36, %p37
      %p39 = scmp.ne.s32.totalorder %s25, %s26
      %p40 = scmp.eq.s32.totalorder %s18, 1
      %p41 = por %p39, %p40
      %p43 = scmp.ne.s32.totalorder %s26, %s42
      %p44 = scmp.eq.s32.totalorder %s18, 0
      %p45 = por %p43, %p44
      %s47 = sadd.s32 %s46, 1
      %p50 = scmp.eq.s32.totalorder %s12, 1
      %p51 = scmp.ne.s32.totalorder %s46, %s48
      %p52 = scmp.eq.s32.totalorder %s12, 0
      %p53 = por %p51, %p52
      %p54 = scmp.ne.s32.totalorder %s46, %s48
      %p55 = scmp.eq.s32.totalorder %s17, 1
      %p56 = por %p54, %p55
      %p57 = scmp.ne.s32.totalorder %s48, %s49
      %p58 = scmp.eq.s32.totalorder %s17, 0
      %p59 = por %p57, %p58
      %p60 = scmp.ne.s32.totalorder %s48, %s49
      %p61 = scmp.eq.s32.totalorder %s18, 1
      %p62 = por %p60, %p61
      %p64 = scmp.ne.s32.totalorder %s49, %s63
      %p65 = scmp.eq.s32.totalorder %s18, 0
      %p66 = por %p64, %p65
      %s68 = sadd.s32 %s67, 1
      %p71 = scmp.eq.s32.totalorder %s12, 1
      %p72 = scmp.ne.s32.totalorder %s67, %s69
      %p73 = scmp.eq.s32.totalorder %s12, 0
      %p74 = por %p72, %p73
      %p75 = scmp.ne.s32.totalorder %s67, %s69
      %p76 = scmp.eq.s32.totalorder %s17, 1
      %p77 = por %p75, %p76
      %p78 = scmp.ne.s32.totalorder %s69, %s70
      %p79 = scmp.eq.s32.totalorder %s17, 0
      %p80 = por %p78, %p79
      %p81 = scmp.ne.s32.totalorder %s69, %s70
      %p82 = scmp.eq.s32.totalorder %s18, 1
      %p83 = por %p81, %p82
      %p85 = scmp.ne.s32.totalorder %s70, %s84
      %p86 = scmp.eq.s32.totalorder %s18, 0
      %p87 = por %p85, %p86
      %s88 = ssub.s32 %s12, %s19
      %p89 = scmp.eq.s32.totalorder %s88, 0
      %s91 = sadd.s32 %s90, 1
      %s92 = scalar_select %p89, %s90, %s91
      %p95 = pneg %p89
      %p96 = scmp.eq.s32.totalorder %s12, 1
      %p97 = por %p95, %p96
      %p98 = scmp.ne.s32.totalorder %s90, %s93
      %p99 = scmp.eq.s32.totalorder %s12, 0
      %p100 = por %p98, %p99
      %p101 = scmp.ne.s32.totalorder %s90, %s93
      %p102 = scmp.eq.s32.totalorder %s17, 1
      %p103 = por %p101, %p102
      %p104 = scmp.ne.s32.totalorder %s93, %s94
      %p105 = scmp.eq.s32.totalorder %s17, 0
      %p106 = por %p104, %p105
      %p107 = scmp.ne.s32.totalorder %s93, %s94
      %p108 = scmp.eq.s32.totalorder %s18, 1
      %p109 = por %p107, %p108
      %p111 = scmp.ne.s32.totalorder %s94, %s110
      %p112 = scmp.eq.s32.totalorder %s18, 0
      %p113 = por %p111, %p112
      %p114 = scmp.le.s32.totalorder 1, %s12
      %p115 = scmp.lt.s32.totalorder %s12, 3
      %p116 = pnand %p114, %p115
      %p117 = pneg %p116
      // Predicated region
      $region9: #{tpu_custom_call.1} parent=5 // pred_check
        _
      $region10: #{tpu_custom_call.1} parent=5 // pred_check_branch
        %119 = sbr.rel (%p116) target = $region12
      $region11: #{tpu_custom_call.1} parent=5 // pred_region
        %s120 = ssub.s32 %s12, 1
        // Predicated region
        $region13: #{tpu_custom_call.1} parent=11 // pred_check
          %p121 = pneg %p59
        $region14: #{tpu_custom_call.1} parent=11 // pred_check_branch
          %123 = sbr.rel (%p121) target = $region16
        $region15: #{tpu_custom_call.1} parent=11 // pred_region
          _
        $region16: #{tpu_custom_call.1} parent=11 // pred_fallthru
          _
        // Predicated region
        $region17: #{tpu_custom_call.1} parent=11 // pred_check
          %p124 = pneg %p80
        $region18: #{tpu_custom_call.1} parent=11 // pred_check_branch
          %126 = sbr.rel (%p124) target = $region20
        $region19: #{tpu_custom_call.1} parent=11 // pred_region
          _
        $region20: #{tpu_custom_call.1} parent=11 // pred_fallthru
          _
      $region12: #{tpu_custom_call.1} parent=5 // pred_fallthru
        _
      %p127 = scmp.lt.s32.totalorder %s12, 2
      // Predicated region
      $region21: #{tpu_custom_call.1} parent=5 // pred_check
        %p128 = pneg %p127
      $region22: #{tpu_custom_call.1} parent=5 // pred_check_branch
        %130 = sbr.rel (%p128) target = $region24
      $region23: #{tpu_custom_call.1} parent=5 // pred_region
        // Predicated region
        $region25: #{tpu_custom_call.1} parent=23 // pred_check
          %p131 = pneg %p32
        $region26: #{tpu_custom_call.1} parent=23 // pred_check_branch
          %133 = sbr.rel (%p131) target = $region28
        $region27: #{tpu_custom_call.1} parent=23 // pred_region
          %p134 = scmp.lt.s32.totalorder %s12, 1
          %s135 = scalar_select %p134, %s12, 1
          %s136 = smul.addr %s135, 2
          %s137 = smul.addr %s136, 4
          %s138 = scalar_lea.vmem %s0, %s137
        $region28: #{tpu_custom_call.1} parent=23 // pred_fallthru
          _
      $region24: #{tpu_custom_call.1} parent=5 // pred_fallthru
        _
      %p139 = scmp.le.s32.totalorder 1, %s12
      %p140 = scmp.lt.s32.totalorder %s12, 3
      %p141 = pnand %p139, %p140
      %p142 = pneg %p141
      // Predicated region
      $region29: #{tpu_custom_call.1} parent=5 // pred_check
        _
      $region30: #{tpu_custom_call.1} parent=5 // pred_check_branch
        %144 = sbr.rel (%p141) target = $region32
      $region31: #{tpu_custom_call.1} parent=5 // pred_region
        %s145 = ssub.s32 %s12, 1
        %p146 = scmp.lt.s32.totalorder %s17, 1
        %s147 = scalar_select %p146, %s17, 1
        %s148 = smul.addr %s147, 2
        %s149 = smul.addr %s148, 4
        %s150 = scalar_lea.vmem %s0, %s149
        %p151 = pneg %p38
        %p152 = pneg %p35
        %p153 = pneg %p59
        %p154 = pneg %p56
        %p155 = pneg %p80
        %p156 = pneg %p77
        %p157 = pneg %p106
        %p158 = pneg %p103
        %s159 = sand.u32 %s93, 1
        %s160 = scalar_lea.sflag [#allocation3], %s159
        %s161 = sand.u32 %s93, 1
        %s162 = smul.addr %s161, 24
        %s163 = scalar_lea.vmem [#allocation2], %s162
        %p164 = scmp.lt.s32.totalorder %s17, 1
        %s165 = scalar_select %p164, %s17, 1
        %s166 = smul.addr %s165, 2
        %s167 = smul.addr %s166, 4
        %s168 = scalar_lea.vmem %s0, %s167
        %v170 = vld [vmem:[%s168] sm:$0xf]
        %v171 = vld [vmem:[%s168 + $0x4] sm:$0xf]
        %v172 = vld [vmem:[%s1] sm:$0xf]
        %v173 = vld [vmem:[%s1 + $0x4] sm:$0xf]
        %v174 = vld [vmem:[%s1 + $0x8] sm:$0xf]
        %v175 = vld [vmem:[%s1 + $0xc] sm:$0xf]
        %v176 = vld [vmem:[%s1 + $0x10] sm:$0xf]
        %v177 = vld [vmem:[%s1 + $0x14] sm:$0xf]
        %v180 = vunpack.c.l.b16 %v170
        %v181 = vunpack.c.l.b16 %v171
        %v182 = vpack.c.b16 %v181, %v180
        %v189 = vunpack.c.l.b16 %v172
        %v190 = vunpack.c.l.b16 %v173
        %v191 = vunpack.c.l.b16 %v174
        %v192 = vunpack.c.l.b16 %v175
        %v193 = vunpack.c.l.b16 %v176
        %v194 = vunpack.c.l.b16 %v177
        %v195 = vpack.c.b16 %v190, %v189
        %v196 = vpack.c.b16 %v192, %v191
        %v197 = vpack.c.b16 %v194, %v193
        %vm201 = vcmask 392192
        %v203 = vsel %vm201, %v182, 0
        %205 = vmatprep.subr.bf16.mxu0 0
        %206 = vmatpush1.bf16.msra.mxu0 %v195
        %207 = vmatprep.subr.bf16.mxu0 0
        %208 = vmatpush1.bf16.msra.mxu0 %v196
        %209 = vmatprep.subr.bf16.mxu0 0
        %210 = vmatpush1.bf16.msra.mxu0 %v197
        %211 = vmatprep.subr.bf16.mxu0 0
        %212 = vmatpush1.bf16.msra.mxu0 0
        %213 = vmatprep.subr.bf16.mxu0 0
        %214 = vmatpush1.bf16.msra.mxu0 0
        %215 = vmatprep.subr.bf16.mxu0 0
        %216 = vmatpush1.bf16.msra.mxu0 0
        %217 = vmatprep.subr.bf16.mxu0 0
        %218 = vmatpush1.bf16.msra.mxu0 0
        %219 = vmatprep.subr.bf16.mxu0 0
        %220 = vmatpush1.bf16.msra.mxu0 0
        %221 = vmatprep.subr.bf16.mxu0 0
        %222 = vmatpush1.bf16.msra.mxu0 0
        %223 = vmatprep.subr.bf16.mxu0 0
        %224 = vmatpush1.bf16.msra.mxu0 0
        %225 = vmatprep.subr.bf16.mxu0 0
        %226 = vmatpush1.bf16.msra.mxu0 0
        %227 = vmatprep.subr.bf16.mxu0 0
        %228 = vmatpush1.bf16.msra.mxu0 0
        %229 = vmatprep.subr.bf16.mxu0 0
        %230 = vmatpush1.bf16.msra.mxu0 0
        %231 = vmatprep.subr.bf16.mxu0 0
        %232 = vmatpush1.bf16.msra.mxu0 0
        %233 = vmatprep.subr.bf16.mxu0 0
        %234 = vmatpush1.bf16.msra.mxu0 0
        %235 = vmatprep.subr.bf16.mxu0 0
        %236 = vmatpush1.bf16.msra.mxu0 0
        %237 = vmatprep.mubr.bf16.mxu0 0
        %238 = vmatmul.mubr.bf16.gmra.mrb[0].mxu0 %v203
        %v239 = vpop.f32.mrb[0].mxu0
        %v240 = vadd.f32 0.0, %v239
        %v241 = vpop.f32.mrb[0].mxu0
        %v242 = vpop.f32.mrb[0].mxu0
        %v243 = vadd.f32 0.0, %v242
        %v244 = vpop.f32.mrb[0].mxu0
        %245 = vdwg.mxu0
        %v246 = vld [vmem:[%s2] sm:$0x1]
        %vm247 = vcmask 253952
        %248 = vst.msk [vmem:[%s163] sm:$0x1] %vm247, %v246
        %vm249 = vcmask 261120
        %250 = vst.msk [vmem:[%s163 + $0x1] sm:$0xff] %vm249, %v240
        %251 = vst.msk [vmem:[%s163 + $0x9] sm:$0xff] %vm249, %v243
        %vm252 = vcmask 260096
        %253 = vst.msk [vmem:[%s163 + $0x11] sm:$0x7f] %vm252, 0.0
        %s254 = sand.u32 %s93, 1
        %s255 = scalar_lea.sflag [#allocation3], %s254
        %s256 = sand.u32 %s93, 1
        %s257 = smul.addr %s256, 24
        %s258 = scalar_lea.vmem [#allocation2], %s257
        // Predicated region
        $region33: #{tpu_custom_call.1} parent=31 // pred_check
          %p259 = pneg %p103
        $region34: #{tpu_custom_call.1} parent=31 // pred_check_branch
          %261 = sbr.rel (%p259) target = $region36
        $region35: #{tpu_custom_call.1} parent=31 // pred_region
          %s263 = ssub.s32 384, 384
          %264 = vsyncadd %s255, %s263
          %s265 = smul.addr %s17, 3
          %s266 = smul.addr %s265, 128
          %s267 = scalar_lea.hbm %s3, %s266
          %s268 = sshll.u32 %s258, 4
          %s269 = int_to_ptr.vmem [resolvable:$true] %s268
          %274 = dma.vmem_to_hbm [thread:$0]  %s269, 384, %s267, %s255, 128, 128, 8
        $region36: #{tpu_custom_call.1} parent=31 // pred_fallthru
          _
      $region32: #{tpu_custom_call.1} parent=5 // pred_fallthru
        _
      %p275 = scmp.le.s32.totalorder 2, %s12
      // Predicated region
      $region37: #{tpu_custom_call.1} parent=5 // pred_check
        %p276 = pneg %p275
      $region38: #{tpu_custom_call.1} parent=5 // pred_check_branch
        %278 = sbr.rel (%p276) target = $region40
      $region39: #{tpu_custom_call.1} parent=5 // pred_region
        %s279 = ssub.s32 %s12, 2
        // Predicated region
        $region41: #{tpu_custom_call.1} parent=39 // pred_check
          %p280 = pneg %p109
        $region42: #{tpu_custom_call.1} parent=39 // pred_check_branch
          %282 = sbr.rel (%p280) target = $region44
        $region43: #{tpu_custom_call.1} parent=39 // pred_region
          %s283 = sand.u32 %s94, 1
          %s284 = scalar_lea.sflag [#allocation3], %s283
          %s285 = sand.u32 %s94, 1
          %s286 = smul.addr %s285, 24
          %s287 = scalar_lea.vmem [#allocation2], %s286
          %288 = dma.done %s284, 384
        $region44: #{tpu_custom_call.1} parent=39 // pred_fallthru
          _
      $region40: #{tpu_custom_call.1} parent=5 // pred_fallthru
        _
    $region6: #{tpu_custom_call.1} parent=1 // loop_footer
      %s16 = sadd.s32 1, %s12
    $region7: #{tpu_custom_call.1} parent=1 // loop_footer_branch
      %11 = sbr.rel target = $region3
    $region8: #{tpu_custom_call.1} parent=1 // loop_exit
      _
    %289 = vsyncpa [#allocation3], 1
    %s290 = scalar_lea.sflag [#allocation3], 1
    %291 = vsyncpa %s290, 1

// kernel: tpu_custom_call.1
$region0: #{tpu_custom_call.1}
  #allocation0 [shape = 'u32[]', space=smem, size = 0x4, offset = 0x4, fixed_abs, tag = 'smem constant byte address 0x4 - core index']
  #allocation1 [shape = 'u32[144,128]{1,0:T(1,128)}', space=vmem, size = 0x12000, scoped, tag = 'internal scratch']
  %s0 = inlined_call_operand.vmem [shape: bf16[2,16,48], index: 0, kind: input, shape index: {}]
  %s1 = inlined_call_operand.vmem [shape: bf16[48,32], index: 1, kind: input, shape index: {}]
  %s2 = inlined_call_operand.vmem [shape: f32[1,32], index: 2, kind: input, shape index: {}]
  %s3 = inlined_call_operand.hbm [shape: f32[2,24,32], index: 3, kind: output, shape index: {}]
  %s4 = sld [smem:[#allocation0]]
  $region45: #{tpu_custom_call.1} parent=0
    _
  %s6 = ssub.s32 1, %s4
  %s7 = scalar_select 0, %s6, %s4
  $region1: #{tpu_custom_call.1} parent=0
    #allocation2 [shape = 'u8[24576]{0}', space=vmem, size = 0x6000, scoped, tag = 'output window, operand 0']
    #allocation3 [shape = 's32[2]{0}', space=sflag, size = 0x8, scoped, tag = 'scoped memory for tpu_custom_call.1']
    %8 = vsyncpa [#allocation3], 0
    %s9 = scalar_lea.sflag [#allocation3], 1
    %10 = vsyncpa %s9, 0
    loop: start=0, step=1, limit=4
    $region2: #{tpu_custom_call.1} parent=1 // loop_pre_header
      _
    $region3: #{tpu_custom_call.1} parent=1 // loop_header
      %s12 = sphi 0, %s16
      %p13 = scmp.ge.s32.totalorder %s12, 4
      %s22 = sphi 0, %s24
      %s25 = sphi 0, %s22
      %s26 = sphi 0, %s25
      %s42 = sphi 0, %s26
      %s46 = sphi 0, %s46
      %s48 = sphi 0, %s46
      %s49 = sphi 0, %s48
      %s63 = sphi 0, %s49
      %s67 = sphi 0, %s67
      %s69 = sphi 0, %s67
      %s70 = sphi 0, %s69
      %s84 = sphi 0, %s70
      %s90 = sphi 0, %s92
      %s93 = sphi 0, %s90
      %s94 = sphi 0, %s93
      %s110 = sphi 0, %s94
    $region4: #{tpu_custom_call.1} parent=1 // loop_header_branch
      %15 = sbr.rel (%p13) target = $region8
    $region5: #{tpu_custom_call.1} parent=1 // loop_body
      %s17 = ssub.s32 %s12, 1
      %s18 = ssub.s32 %s12, 2
      %s19 = sadd.s32 %s12, 1
      %s20 = ssub.s32 %s12, %s19
      %p21 = scmp.eq.s32.totalorder %s20, 0
      %s23 = sadd.s32 %s22, 1
      %s24 = scalar_select %p21, %s22, %s23
      %p27 = pneg %p21
      %p28 = scmp.eq.s32.totalorder %s12, 1
      %p29 = por %p27, %p28
      %p30 = scmp.ne.s32.totalorder %s22, %s25
      %p31 = scmp.eq.s32.totalorder %s12, 0
      %p32 = por %p30, %p31
      %p33 = scmp.ne.s32.totalorder %s22, %s25
      %p34 = scmp.eq.s32.totalorder %s17, 1
      %p35 = por %p33, %p34
      %p36 = scmp.ne.s32.totalorder %s25, %s26
      %p37 = scmp.eq.s32.totalorder %s17, 0
      %p38 = por %p36, %p37
      %p39 = scmp.ne.s32.totalorder %s25, %s26
      %p40 = scmp.eq.s32.totalorder %s18, 1
      %p41 = por %p39, %p40
      %p43 = scmp.ne.s32.totalorder %s26, %s42
      %p44 = scmp.eq.s32.totalorder %s18, 0
      %p45 = por %p43, %p44
      %s47 = sadd.s32 %s46, 1
      %p50 = scmp.eq.s32.totalorder %s12, 1
      %p51 = scmp.ne.s32.totalorder %s46, %s48
      %p52 = scmp.eq.s32.totalorder %s12, 0
      %p53 = por %p51, %p52
      %p54 = scmp.ne.s32.totalorder %s46, %s48
      %p55 = scmp.eq.s32.totalorder %s17, 1
      %p56 = por %p54, %p55
      %p57 = scmp.ne.s32.totalorder %s48, %s49
      %p58 = scmp.eq.s32.totalorder %s17, 0
      %p59 = por %p57, %p58
      %p60 = scmp.ne.s32.totalorder %s48, %s49
      %p61 = scmp.eq.s32.totalorder %s18, 1
      %p62 = por %p60, %p61
      %p64 = scmp.ne.s32.totalorder %s49, %s63
      %p65 = scmp.eq.s32.totalorder %s18, 0
      %p66 = por %p64, %p65
      %s68 = sadd.s32 %s67, 1
      %p71 = scmp.eq.s32.totalorder %s12, 1
      %p72 = scmp.ne.s32.totalorder %s67, %s69
      %p73 = scmp.eq.s32.totalorder %s12, 0
      %p74 = por %p72, %p73
      %p75 = scmp.ne.s32.totalorder %s67, %s69
      %p76 = scmp.eq.s32.totalorder %s17, 1
      %p77 = por %p75, %p76
      %p78 = scmp.ne.s32.totalorder %s69, %s70
      %p79 = scmp.eq.s32.totalorder %s17, 0
      %p80 = por %p78, %p79
      %p81 = scmp.ne.s32.totalorder %s69, %s70
      %p82 = scmp.eq.s32.totalorder %s18, 1
      %p83 = por %p81, %p82
      %p85 = scmp.ne.s32.totalorder %s70, %s84
      %p86 = scmp.eq.s32.totalorder %s18, 0
      %p87 = por %p85, %p86
      %s88 = ssub.s32 %s12, %s19
      %p89 = scmp.eq.s32.totalorder %s88, 0
      %s91 = sadd.s32 %s90, 1
      %s92 = scalar_select %p89, %s90, %s91
      %p95 = pneg %p89
      %p96 = scmp.eq.s32.totalorder %s12, 1
      %p97 = por %p95, %p96
      %p98 = scmp.ne.s32.totalorder %s90, %s93
      %p99 = scmp.eq.s32.totalorder %s12, 0
      %p100 = por %p98, %p99
      %p101 = scmp.ne.s32.totalorder %s90, %s93
      %p102 = scmp.eq.s32.totalorder %s17, 1
      %p103 = por %p101, %p102
      %p104 = scmp.ne.s32.totalorder %s93, %s94
      %p105 = scmp.eq.s32.totalorder %s17, 0
      %p106 = por %p104, %p105
      %p107 = scmp.ne.s32.totalorder %s93, %s94
      %p108 = scmp.eq.s32.totalorder %s18, 1
      %p109 = por %p107, %p108
      %p111 = scmp.ne.s32.totalorder %s94, %s110
      %p112 = scmp.eq.s32.totalorder %s18, 0
      %p113 = por %p111, %p112
      %p114 = scmp.le.s32.totalorder 1, %s12
      %p115 = scmp.lt.s32.totalorder %s12, 3
      %p116 = pnand %p114, %p115
      %p117 = pneg %p116
      // Predicated region
      $region9: #{tpu_custom_call.1} parent=5 // pred_check
        _
      $region10: #{tpu_custom_call.1} parent=5 // pred_check_branch
        %119 = sbr.rel (%p116) target = $region12
      $region11: #{tpu_custom_call.1} parent=5 // pred_region
        %s120 = ssub.s32 %s12, 1
        // Predicated region
        $region13: #{tpu_custom_call.1} parent=11 // pred_check
          %p121 = pneg %p59
        $region14: #{tpu_custom_call.1} parent=11 // pred_check_branch
          %123 = sbr.rel (%p121) target = $region16
        $region15: #{tpu_custom_call.1} parent=11 // pred_region
          _
        $region16: #{tpu_custom_call.1} parent=11 // pred_fallthru
          _
        // Predicated region
        $region17: #{tpu_custom_call.1} parent=11 // pred_check
          %p124 = pneg %p80
        $region18: #{tpu_custom_call.1} parent=11 // pred_check_branch
          %126 = sbr.rel (%p124) target = $region20
        $region19: #{tpu_custom_call.1} parent=11 // pred_region
          _
        $region20: #{tpu_custom_call.1} parent=11 // pred_fallthru
          _
      $region12: #{tpu_custom_call.1} parent=5 // pred_fallthru
        _
      %p127 = scmp.lt.s32.totalorder %s12, 2
      // Predicated region
      $region21: #{tpu_custom_call.1} parent=5 // pred_check
        %p128 = pneg %p127
      $region22: #{tpu_custom_call.1} parent=5 // pred_check_branch
        %130 = sbr.rel (%p128) target = $region24
      $region23: #{tpu_custom_call.1} parent=5 // pred_region
        // Predicated region
        $region25: #{tpu_custom_call.1} parent=23 // pred_check
          %p131 = pneg %p32
        $region26: #{tpu_custom_call.1} parent=23 // pred_check_branch
          %133 = sbr.rel (%p131) target = $region28
        $region27: #{tpu_custom_call.1} parent=23 // pred_region
          %p134 = scmp.lt.s32.totalorder %s12, 1
          %s135 = scalar_select %p134, %s12, 1
          %s136 = smul.addr %s135, 2
          %s137 = smul.addr %s136, 4
          %s138 = scalar_lea.vmem %s0, %s137
        $region28: #{tpu_custom_call.1} parent=23 // pred_fallthru
          _
      $region24: #{tpu_custom_call.1} parent=5 // pred_fallthru
        _
      %p139 = scmp.le.s32.totalorder 1, %s12
      %p140 = scmp.lt.s32.totalorder %s12, 3
      %p141 = pnand %p139, %p140
      %p142 = pneg %p141
      // Predicated region
      $region29: #{tpu_custom_call.1} parent=5 // pred_check
        _
      $region30: #{tpu_custom_call.1} parent=5 // pred_check_branch
        %144 = sbr.rel (%p141) target = $region32
      $region31: #{tpu_custom_call.1} parent=5 // pred_region
        %s145 = ssub.s32 %s12, 1
        %p146 = scmp.lt.s32.totalorder %s17, 1
        %s147 = scalar_select %p146, %s17, 1
        %s148 = smul.addr %s147, 2
        %s149 = smul.addr %s148, 4
        %s150 = scalar_lea.vmem %s0, %s149
        %p151 = pneg %p38
        %p152 = pneg %p35
        %p153 = pneg %p59
        %p154 = pneg %p56
        %p155 = pneg %p80
        %p156 = pneg %p77
        %p157 = pneg %p106
        %p158 = pneg %p103
        %s159 = sand.u32 %s93, 1
        %s160 = scalar_lea.sflag [#allocation3], %s159
        %s161 = sand.u32 %s93, 1
        %s162 = smul.addr %s161, 24
        %s163 = scalar_lea.vmem [#allocation2], %s162
        %p164 = scmp.lt.s32.totalorder %s17, 1
        %s165 = scalar_select %p164, %s17, 1
        %s166 = smul.addr %s165, 2
        %s167 = smul.addr %s166, 4
        %s168 = scalar_lea.vmem %s0, %s167
        %v170 = vld [vmem:[%s168] sm:$0xf]
        %v171 = vld [vmem:[%s168 + $0x4] sm:$0xf]
        %v172 = vld [vmem:[%s1] sm:$0xf]
        %v173 = vld [vmem:[%s1 + $0x4] sm:$0xf]
        %v174 = vld [vmem:[%s1 + $0x8] sm:$0xf]
        %v175 = vld [vmem:[%s1 + $0xc] sm:$0xf]
        %v176 = vld [vmem:[%s1 + $0x10] sm:$0xf]
        %v177 = vld [vmem:[%s1 + $0x14] sm:$0xf]
        %v180 = vunpack.c.l.b16 %v170
        %v181 = vunpack.c.l.b16 %v171
        %v182 = vpack.c.b16 %v181, %v180
        %v189 = vunpack.c.l.b16 %v172
        %v190 = vunpack.c.l.b16 %v173
        %v191 = vunpack.c.l.b16 %v174
        %v192 = vunpack.c.l.b16 %v175
        %v193 = vunpack.c.l.b16 %v176
        %v194 = vunpack.c.l.b16 %v177
        %v195 = vpack.c.b16 %v190, %v189
        %v196 = vpack.c.b16 %v192, %v191
        %v197 = vpack.c.b16 %v194, %v193
        %vm201 = vcmask 392192
        %v203 = vsel %vm201, %v182, 0
        %205 = vmatprep.subr.bf16.mxu0 0
        %206 = vmatpush1.bf16.msra.mxu0 %v195
        %207 = vmatprep.subr.bf16.mxu0 0
        %208 = vmatpush1.bf16.msra.mxu0 %v196
        %209 = vmatprep.subr.bf16.mxu0 0
        %210 = vmatpush1.bf16.msra.mxu0 %v197
        %211 = vmatprep.subr.bf16.mxu0 0
        %212 = vmatpush1.bf16.msra.mxu0 0
        %213 = vmatprep.subr.bf16.mxu0 0
        %214 = vmatpush1.bf16.msra.mxu0 0
        %215 = vmatprep.subr.bf16.mxu0 0
        %216 = vmatpush1.bf16.msra.mxu0 0
        %217 = vmatprep.subr.bf16.mxu0 0
        %218 = vmatpush1.bf16.msra.mxu0 0
        %219 = vmatprep.subr.bf16.mxu0 0
        %220 = vmatpush1.bf16.msra.mxu0 0
        %221 = vmatprep.subr.bf16.mxu0 0
        %222 = vmatpush1.bf16.msra.mxu0 0
        %223 = vmatprep.subr.bf16.mxu0 0
        %224 = vmatpush1.bf16.msra.mxu0 0
        %225 = vmatprep.subr.bf16.mxu0 0
        %226 = vmatpush1.bf16.msra.mxu0 0
        %227 = vmatprep.subr.bf16.mxu0 0
        %228 = vmatpush1.bf16.msra.mxu0 0
        %229 = vmatprep.subr.bf16.mxu0 0
        %230 = vmatpush1.bf16.msra.mxu0 0
        %231 = vmatprep.subr.bf16.mxu0 0
        %232 = vmatpush1.bf16.msra.mxu0 0
        %233 = vmatprep.subr.bf16.mxu0 0
        %234 = vmatpush1.bf16.msra.mxu0 0
        %235 = vmatprep.subr.bf16.mxu0 0
        %236 = vmatpush1.bf16.msra.mxu0 0
        %237 = vmatprep.mubr.bf16.mxu0 0
        %238 = vmatmul.mubr.bf16.gmra.mrb[0].mxu0 %v203
        %v239 = vpop.f32.mrb[0].mxu0
        %v240 = vadd.f32 0.0, %v239
        %v241 = vpop.f32.mrb[0].mxu0
        %v242 = vpop.f32.mrb[0].mxu0
        %v243 = vadd.f32 0.0, %v242
        %v244 = vpop.f32.mrb[0].mxu0
        %245 = vdwg.mxu0
        %v246 = vld [vmem:[%s2] sm:$0x1]
        %vm247 = vcmask 253952
        %248 = vst.msk [vmem:[%s163] sm:$0x1] %vm247, %v246
        %vm249 = vcmask 261120
        %250 = vst.msk [vmem:[%s163 + $0x1] sm:$0xff] %vm249, %v240
        %251 = vst.msk [vmem:[%s163 + $0x9] sm:$0xff] %vm249, %v243
        %vm252 = vcmask 260096
        %253 = vst.msk [vmem:[%s163 + $0x11] sm:$0x7f] %vm252, 0.0
        %s254 = sand.u32 %s93, 1
        %s255 = scalar_lea.sflag [#allocation3], %s254
        %s256 = sand.u32 %s93, 1
        %s257 = smul.addr %s256, 24
        %s258 = scalar_lea.vmem [#allocation2], %s257
        // Predicated region
        $region33: #{tpu_custom_call.1} parent=31 // pred_check
          %p259 = pneg %p103
        $region34: #{tpu_custom_call.1} parent=31 // pred_check_branch
          %261 = sbr.rel (%p259) target = $region36
        $region35: #{tpu_custom_call.1} parent=31 // pred_region
          %s263 = ssub.s32 384, 384
          %264 = vsyncadd %s255, %s263
          %s265 = smul.addr %s17, 3
          %s266 = smul.addr %s265, 128
          %s267 = scalar_lea.hbm %s3, %s266
          %s268 = sshll.u32 %s258, 4
          %s269 = int_to_ptr.vmem [resolvable:$true] %s268
          %274 = dma.vmem_to_hbm [thread:$0]  %s269, 384, %s267, %s255, 128, 128, 8
        $region36: #{tpu_custom_call.1} parent=31 // pred_fallthru
          _
      $region32: #{tpu_custom_call.1} parent=5 // pred_fallthru
        _
      %p275 = scmp.le.s32.totalorder 2, %s12
      // Predicated region
      $region37: #{tpu_custom_call.1} parent=5 // pred_check
        %p276 = pneg %p275
      $region38: #{tpu_custom_call.1} parent=5 // pred_check_branch
        %278 = sbr.rel (%p276) target = $region40
      $region39: #{tpu_custom_call.1} parent=5 // pred_region
        %s279 = ssub.s32 %s12, 2
        // Predicated region
        $region41: #{tpu_custom_call.1} parent=39 // pred_check
          %p280 = pneg %p109
        $region42: #{tpu_custom_call.1} parent=39 // pred_check_branch
          %282 = sbr.rel (%p280) target = $region44
        $region43: #{tpu_custom_call.1} parent=39 // pred_region
          %s283 = sand.u32 %s94, 1
          %s284 = scalar_lea.sflag [#allocation3], %s283
          %s285 = sand.u32 %s94, 1
          %s286 = smul.addr %s285, 24
          %s287 = scalar_lea.vmem [#allocation2], %s286
          %288 = dma.done %s284, 384
        $region44: #{tpu_custom_call.1} parent=39 // pred_fallthru
          _
      $region40: #{tpu_custom_call.1} parent=5 // pred_fallthru
        _
    $region6: #{tpu_custom_call.1} parent=1 // loop_footer
      %s16 = sadd.s32 1, %s12
    $region7: #{tpu_custom_call.1} parent=1 // loop_footer_branch
      %11 = sbr.rel target = $region3
    $region8: #{tpu_custom_call.1} parent=1 // loop_exit
      _
    %289 = vsyncpa [#allocation3], 1
    %s290 = scalar_lea.sflag [#allocation3], 1
    %291 = vsyncpa %s290, 1

</llo_original>
